<compile_context>
chip_gen: v5e
topology: v5e:2x2
jax: 0.10.0
libtpu: 0.0.40
codegen_flags: <defaults>
</compile_context>

<pallas_src>
import jax
import jax.numpy as jnp
from jax.experimental import pallas as pl
from jax.experimental.pallas import tpu as pltpu

_EPS = 1e-8


def _round_up(x, m):
    return ((x + m - 1) // m) * m


def _round_down(x, m):
    return (x // m) * m


def _vmem_budget_bytes():
    """Generation-aware VMEM budget (v5e/v6e: 128 MiB physical, v7x: 64 MiB)."""
    try:
        phys = int(pltpu.get_tpu_info().vmem_capacity_bytes)
    except Exception:
        phys = 64 << 20            # conservative: assume the smallest (v7x) VMEM
    return min(phys // 2, 48 << 20)


def _row_tile(s_rows, row_bytes, other_steps, target_bytes):
    """Rows per block: a multiple of 8 (or the full dim), ~target_bytes big, and
    split so the overall grid keeps >= 2 steps when there is enough work."""
    if s_rows <= 8:
        return s_rows
    t = max(8, _round_down(target_bytes // row_bytes, 8))
    if t >= s_rows:
        t = s_rows
    if other_steps <= 1 and s_rows >= 16 and pl.cdiv(s_rows, t) <= 1:
        t = max(8, _round_up(pl.cdiv(s_rows, 2), 8))   # guarantee >= 2 grid steps
    return t


def _hue_kernel(factor_ref, x_ref, o_ref):
    """One vectorized hue shift over a (nb, 3, rows_tile, lane) block.

    factor_ref: (1,) SMEM scalar -- hue shift in sextant units ([-3, 3]).
    """
    fs = factor_ref[0]
    r = x_ref[:, 0, :, :].astype(jnp.float32)        # (nb, t, lane) slabs
    g = x_ref[:, 1, :, :].astype(jnp.float32)
    b = x_ref[:, 2, :, :].astype(jnp.float32)

    maxc = jnp.maximum(jnp.maximum(r, g), b)
    minc = jnp.minimum(jnp.minimum(r, g), b)
    v = maxc
    deltac = maxc - minc                              # == v * s (up to the +eps guard)
    dsafe = jnp.where(deltac == 0.0, 1.0, deltac)

    # Hue in sextant units via one exact divide (no approx reciprocals).
    base = jnp.where(maxc == r, 0.0, jnp.where(maxc == g, 2.0, 4.0))
    num = jnp.where(maxc == r, g - b, jnp.where(maxc == g, b - r, r - g))
    h6 = base + num / dsafe + fs                      # in (-4, 8)
    h6 = jnp.where(h6 < 0.0, h6 + 6.0, h6)
    h6 = jnp.where(h6 >= 6.0, h6 - 6.0, h6)           # wrapped into [0, 6)

    def channel(n):
        k = n + h6
        k = jnp.where(k >= 6.0, k - 6.0, k)           # (n + h6) mod 6
        w = jnp.clip(jnp.minimum(k, 4.0 - k), 0.0, 1.0)
        # torch.clamp(x, 0, 1) of the module is folded in here.
        return jnp.clip(v - deltac * w, 0.0, 1.0).astype(o_ref.dtype)

    o_ref[:, 0, :, :] = channel(5.0)
    o_ref[:, 1, :, :] = channel(3.0)
    o_ref[:, 2, :, :] = channel(1.0)


def _launch(arr, factor_sextant, block_target, vmem_limit):
    """Run the hue kernel over arr of shape (n, 3, s_rows, lane)."""
    n, _, s_rows, lane = arr.shape
    itemsize = jnp.dtype(arr.dtype).itemsize
    row_bytes = 3 * _round_up(lane, 128) * itemsize   # VMEM cost incl. lane padding
    per_image = row_bytes * max(s_rows, 8)            # incl. sublane padding

    # Images per block (amortizes the ~0.35us per-grid-step overhead), capped so
    # the grid keeps >= 2 steps for megacore sharding / DMA-compute overlap.
    nb = max(1, min(n, block_target // max(per_image, 1)))
    if n >= 2:
        nb = min(nb, (n + 1) // 2)
    grid_n = pl.cdiv(n, nb)

    t = _row_tile(s_rows, row_bytes, grid_n, max(row_bytes, block_target // nb))
    grid = (grid_n, pl.cdiv(s_rows, t))
    block = (nb, 3, t, lane)

    return pl.pallas_call(
        _hue_kernel,
        out_shape=jax.ShapeDtypeStruct(arr.shape, arr.dtype),
        grid=grid,
        in_specs=[
            # Single 4-byte scalar; plain SMEM operand (scalar prefetch not needed).
            pl.BlockSpec(memory_space=pltpu.SMEM),
            pl.BlockSpec(block, lambda i, j: (i, 0, j, 0)),
        ],
        out_specs=pl.BlockSpec(block, lambda i, j: (i, 0, j, 0)),
        compiler_params=pltpu.CompilerParams(
            dimension_semantics=("parallel", "parallel"),
            vmem_limit_bytes=int(vmem_limit),
        ),
        # TODO(synk): input_output_aliases={1: 0} is worthwhile when the caller
        # can donate x; left off so a still-live input never forces a defensive copy.
    )(factor_sextant, arr)


def hue_layer_forward(x, params):
    """Training-branch forward of HueLayer.

    x: (N, 3, H, W) images in [0, 1]; params: (1,) float (the nn.Parameter).
    """
    if x.shape[0] == 0:
        return x
    N, C, H, W = x.shape
    assert C == 3, "HueLayer expects RGB input (C == 3)"

    # factor (radians) = tanh(p) * pi; kept in sextant units (radians * 3/pi) so
    # the kernel needs a single wrap instead of three mods.
    factor_sextant = (jnp.tanh(params.astype(jnp.float32)) * 3.0).reshape(1)

    flat = H * W
    budget = _vmem_budget_bytes()
    block_target = budget // 8     # 2x(in) + 2x(out) live blocks + compiler temps

    if flat % 128 == 0 and flat >= 8 * 128:
        # Path A: free reshape to a lane- and sublane-dense (N, 3, rows, lane)
        # view.  No extra HBM passes, unmasked vector stores.
        lane = max(l for l in (512, 256, 128) if flat % l == 0 and flat // l >= 8)
        rows = flat // lane
        arr = x.reshape(N, C, rows, lane)
        out = _launch(arr, factor_sextant, block_target, budget)
        return out.reshape(N, C, H, W)

    if H >= 8 and W >= 128:
        # Path C: tile (H, W) directly with full-W blocks.  The ragged lane edge
        # is handled by masked stores; no wrapper-side pad/slice round trips.
        return _launch(x, factor_sextant, block_target, budget)

    # Path B: small / oddly shaped images.  Repack pixels channel-major
    # (3, N*H*W) -> (1, 3, R, 128) so every vreg is fully occupied; the repack
    # copies are cheap because this path only handles small tensors.
    lane = 128
    total = N * flat
    rows = max(8, pl.cdiv(total, lane))
    pad = rows * lane - total
    xp = jnp.transpose(x.reshape(N, C, flat), (1, 0, 2)).reshape(C, total)
    if pad:
        xp = jnp.pad(xp, ((0, 0), (0, pad)))
    arr = xp.reshape(1, C, rows, lane)
    out = _launch(arr, factor_sextant, block_target, budget)
    out = out.reshape(C, rows * lane)[:, :total].reshape(C, N, flat)
    return jnp.transpose(out, (1, 0, 2)).reshape(N, C, H, W)


def _reference(x, params):
    """Pure-JAX mirror of the PyTorch training-branch forward (exact divides)."""
    two_pi = 2.0 * jnp.pi
    factor = jnp.tanh(params.astype(jnp.float32))[0] * jnp.pi
    r, g, b = x[:, 0], x[:, 1], x[:, 2]
    maxc = jnp.maximum(jnp.maximum(r, g), b)
    minc = jnp.minimum(jnp.minimum(r, g), b)
    v = maxc
    deltac = maxc - minc
    s = deltac / (maxc + _EPS)
    dsafe = jnp.where(deltac == 0.0, 1.0, deltac)
    rc, gc, bc = (maxc - r) / dsafe, (maxc - g) / dsafe, (maxc - b) / dsafe
    h = jnp.where(maxc == r, bc - gc,
                  jnp.where(maxc == g, 2.0 + rc - bc, 4.0 + gc - rc))
    h = jnp.mod(h / 6.0, 1.0) * two_pi
    h = jnp.mod(h + factor, two_pi)
    h6 = jnp.mod(h / two_pi * 6.0, 6.0)
    hi = jnp.floor(h6)
    f = h6 - hi
    p = v * (1.0 - s)
    q = v * (1.0 - f * s)
    t = v * (1.0 - (1.0 - f) * s)

    def sel(c0, c1, c2, c3, c4, c5):
        return jnp.where(hi < 1, c0, jnp.where(hi < 2, c1, jnp.where(hi < 3, c2,
               jnp.where(hi < 4, c3, jnp.where(hi < 5, c4, c5)))))

    out = jnp.stack([sel(v, q, p, p, t, v),
                     sel(t, v, v, q, p, p),
                     sel(p, p, t, v, v, q)], axis=1)
    return jnp.clip(out, 0.0, 1.0)


if __name__ == "__main__":
    key = jax.random.PRNGKey(0)
    kp, k1, k2, k3, k4 = jax.random.split(key, 5)
    # Deterministic stand-in for nn.Parameter(torch.rand(1)).
    params = jax.random.uniform(kp, (1,), dtype=jnp.float32)

    cases = [
        ("packed small 16x16 (path B)", (2, 3, 16, 16), k1),
        ("packed ragged 24x40 (path B)", (3, 3, 24, 40), k2),
        ("lane-aligned 32x32 (path A)", (2, 3, 32, 32), k3),
        ("direct HxW ragged 16x135 (path C)", (1, 3, 16, 135), k4),
    ]
    for name, shape, k in cases:
        x = jax.random.uniform(k, shape, dtype=jnp.float32)
        out = jax.block_until_ready(hue_layer_forward(x, params))
        ref = _reference(x, params)
        assert out.shape == x.shape and out.dtype == x.dtype, name
        err = float(jnp.max(jnp.abs(out - ref)))
        assert err < 1e-4, f"mismatch vs reference ({name}): max abs err = {err}"

    print("KERNEL_OK")
</pallas_src>

<mosaic_0001>
module attributes {stable_mosaic.version = 11 : i64} {
  func.func @_hue_kernel(%arg0: i32, %arg1: i32, %arg2: memref<1xf32, #tpu.memory_space<smem>>, %arg3: memref<1x3x8x128xf32, #tpu.memory_space<vmem>>, %arg4: memref<1x3x8x128xf32, #tpu.memory_space<vmem>>) attributes {dimension_semantics = [#tpu.dimension_semantics<parallel>, #tpu.dimension_semantics<parallel>], iteration_bounds = array<i64: 1, 1>, scalar_prefetch = 0 : i64, scratch_operands = 0 : i64, tpu.core_type = #tpu.core_type<tc>, window_params = [{transform_indices = @transform_0, window_bounds = array<i64: 1>}, {transform_indices = @transform_1, window_bounds = array<i64: 1, 3, 8, 128>}, {transform_indices = @transform_2, window_bounds = array<i64: 1, 3, 8, 128>}]} {
    %c0 = arith.constant 0 : index
    %0 = memref.load %arg2[%c0] : memref<1xf32, #tpu.memory_space<smem>>
    %c0_0 = arith.constant 0 : index
    %c0_1 = arith.constant 0 : index
    %c0_2 = arith.constant 0 : index
    %c0_3 = arith.constant 0 : index
    %1 = vector.load %arg3[%c0_0, %c0_1, %c0_2, %c0_3] : memref<1x3x8x128xf32, #tpu.memory_space<vmem>>, vector<1x1x8x128xf32>
    %2 = vector.shape_cast %1 : vector<1x1x8x128xf32> to vector<1x8x128xf32>
    %c0_4 = arith.constant 0 : index
    %c1 = arith.constant 1 : index
    %c0_5 = arith.constant 0 : index
    %c0_6 = arith.constant 0 : index
    %3 = vector.load %arg3[%c0_4, %c1, %c0_5, %c0_6] : memref<1x3x8x128xf32, #tpu.memory_space<vmem>>, vector<1x1x8x128xf32>
    %4 = vector.shape_cast %3 : vector<1x1x8x128xf32> to vector<1x8x128xf32>
    %c0_7 = arith.constant 0 : index
    %c2 = arith.constant 2 : index
    %c0_8 = arith.constant 0 : index
    %c0_9 = arith.constant 0 : index
    %5 = vector.load %arg3[%c0_7, %c2, %c0_8, %c0_9] : memref<1x3x8x128xf32, #tpu.memory_space<vmem>>, vector<1x1x8x128xf32>
    %6 = vector.shape_cast %5 : vector<1x1x8x128xf32> to vector<1x8x128xf32>
    %7 = arith.maximumf %2, %4 : vector<1x8x128xf32>
    %8 = arith.maximumf %7, %6 : vector<1x8x128xf32>
    %9 = arith.minimumf %2, %4 : vector<1x8x128xf32>
    %10 = arith.minimumf %9, %6 : vector<1x8x128xf32>
    %11 = arith.subf %8, %10 : vector<1x8x128xf32>
    %cst = arith.constant 0.000000e+00 : f32
    %12 = vector.broadcast %cst : f32 to vector<1x8x128xf32>
    %13 = arith.cmpf oeq, %11, %12 : vector<1x8x128xf32>
    %cst_10 = arith.constant 1.000000e+00 : f32
    %14 = vector.broadcast %cst_10 : f32 to vector<1x8x128xf32>
    %15 = arith.select %13, %14, %11 : vector<1x8x128xi1>, vector<1x8x128xf32>
    %16 = arith.cmpf oeq, %8, %2 : vector<1x8x128xf32>
    %17 = arith.cmpf oeq, %8, %4 : vector<1x8x128xf32>
    %cst_11 = arith.constant 2.000000e+00 : f32
    %cst_12 = arith.constant 4.000000e+00 : f32
    %18 = vector.broadcast %cst_11 : f32 to vector<1x8x128xf32>
    %19 = vector.broadcast %cst_12 : f32 to vector<1x8x128xf32>
    %20 = arith.select %17, %18, %19 : vector<1x8x128xi1>, vector<1x8x128xf32>
    %cst_13 = arith.constant 0.000000e+00 : f32
    %21 = vector.broadcast %cst_13 : f32 to vector<1x8x128xf32>
    %22 = arith.select %16, %21, %20 : vector<1x8x128xi1>, vector<1x8x128xf32>
    %23 = arith.cmpf oeq, %8, %2 : vector<1x8x128xf32>
    %24 = arith.subf %4, %6 : vector<1x8x128xf32>
    %25 = arith.cmpf oeq, %8, %4 : vector<1x8x128xf32>
    %26 = arith.subf %6, %2 : vector<1x8x128xf32>
    %27 = arith.subf %2, %4 : vector<1x8x128xf32>
    %28 = arith.select %25, %26, %27 : vector<1x8x128xi1>, vector<1x8x128xf32>
    %29 = arith.select %23, %24, %28 : vector<1x8x128xi1>, vector<1x8x128xf32>
    %30 = arith.divf %29, %15 : vector<1x8x128xf32>
    %31 = arith.addf %22, %30 : vector<1x8x128xf32>
    %32 = vector.broadcast %0 : f32 to vector<1x8x128xf32>
    %33 = arith.addf %31, %32 : vector<1x8x128xf32>
    %cst_14 = arith.constant 0.000000e+00 : f32
    %34 = vector.broadcast %cst_14 : f32 to vector<1x8x128xf32>
    %35 = arith.cmpf olt, %33, %34 : vector<1x8x128xf32>
    %cst_15 = arith.constant 6.000000e+00 : f32
    %36 = vector.broadcast %cst_15 : f32 to vector<1x8x128xf32>
    %37 = arith.addf %33, %36 : vector<1x8x128xf32>
    %38 = arith.select %35, %37, %33 : vector<1x8x128xi1>, vector<1x8x128xf32>
    %cst_16 = arith.constant 6.000000e+00 : f32
    %39 = vector.broadcast %cst_16 : f32 to vector<1x8x128xf32>
    %40 = arith.cmpf oge, %38, %39 : vector<1x8x128xf32>
    %cst_17 = arith.constant 6.000000e+00 : f32
    %41 = vector.broadcast %cst_17 : f32 to vector<1x8x128xf32>
    %42 = arith.subf %38, %41 : vector<1x8x128xf32>
    %43 = arith.select %40, %42, %38 : vector<1x8x128xi1>, vector<1x8x128xf32>
    %cst_18 = arith.constant 5.000000e+00 : f32
    %44 = vector.broadcast %cst_18 : f32 to vector<1x8x128xf32>
    %45 = arith.addf %44, %43 : vector<1x8x128xf32>
    %cst_19 = arith.constant 6.000000e+00 : f32
    %46 = vector.broadcast %cst_19 : f32 to vector<1x8x128xf32>
    %47 = arith.cmpf oge, %45, %46 : vector<1x8x128xf32>
    %cst_20 = arith.constant 6.000000e+00 : f32
    %48 = vector.broadcast %cst_20 : f32 to vector<1x8x128xf32>
    %49 = arith.subf %45, %48 : vector<1x8x128xf32>
    %50 = arith.select %47, %49, %45 : vector<1x8x128xi1>, vector<1x8x128xf32>
    %cst_21 = arith.constant 4.000000e+00 : f32
    %51 = vector.broadcast %cst_21 : f32 to vector<1x8x128xf32>
    %52 = arith.subf %51, %50 : vector<1x8x128xf32>
    %53 = arith.minimumf %50, %52 : vector<1x8x128xf32>
    %cst_22 = arith.constant 0.000000e+00 : f32
    %cst_23 = arith.constant 1.000000e+00 : f32
    %54 = vector.broadcast %cst_22 : f32 to vector<1x8x128xf32>
    %55 = arith.maximumf %54, %53 : vector<1x8x128xf32>
    %56 = vector.broadcast %cst_23 : f32 to vector<1x8x128xf32>
    %57 = arith.minimumf %56, %55 : vector<1x8x128xf32>
    %58 = arith.mulf %11, %57 : vector<1x8x128xf32>
    %59 = arith.subf %8, %58 : vector<1x8x128xf32>
    %cst_24 = arith.constant 0.000000e+00 : f32
    %cst_25 = arith.constant 1.000000e+00 : f32
    %60 = vector.broadcast %cst_24 : f32 to vector<1x8x128xf32>
    %61 = arith.maximumf %60, %59 : vector<1x8x128xf32>
    %62 = vector.broadcast %cst_25 : f32 to vector<1x8x128xf32>
    %63 = arith.minimumf %62, %61 : vector<1x8x128xf32>
    %c0_26 = arith.constant 0 : index
    %c0_27 = arith.constant 0 : index
    %c0_28 = arith.constant 0 : index
    %c0_29 = arith.constant 0 : index
    %64 = vector.load %arg4[%c0_26, %c0_27, %c0_28, %c0_29] : memref<1x3x8x128xf32, #tpu.memory_space<vmem>>, vector<1x1x8x128xf32>
    %65 = vector.shape_cast %64 : vector<1x1x8x128xf32> to vector<1x8x128xf32>
    %66 = vector.shape_cast %63 : vector<1x8x128xf32> to vector<1x1x8x128xf32>
    tpu.vector_store %arg4[%c0_26, %c0_27, %c0_28, %c0_29], %66 {strides = array<i32>} : memref<1x3x8x128xf32, #tpu.memory_space<vmem>>, vector<1x1x8x128xf32>,
    %cst_30 = arith.constant 3.000000e+00 : f32
    %67 = vector.broadcast %cst_30 : f32 to vector<1x8x128xf32>
    %68 = arith.addf %67, %43 : vector<1x8x128xf32>
    %cst_31 = arith.constant 6.000000e+00 : f32
    %69 = vector.broadcast %cst_31 : f32 to vector<1x8x128xf32>
    %70 = arith.cmpf oge, %68, %69 : vector<1x8x128xf32>
    %cst_32 = arith.constant 6.000000e+00 : f32
    %71 = vector.broadcast %cst_32 : f32 to vector<1x8x128xf32>
    %72 = arith.subf %68, %71 : vector<1x8x128xf32>
    %73 = arith.select %70, %72, %68 : vector<1x8x128xi1>, vector<1x8x128xf32>
    %cst_33 = arith.constant 4.000000e+00 : f32
    %74 = vector.broadcast %cst_33 : f32 to vector<1x8x128xf32>
    %75 = arith.subf %74, %73 : vector<1x8x128xf32>
    %76 = arith.minimumf %73, %75 : vector<1x8x128xf32>
    %cst_34 = arith.constant 0.000000e+00 : f32
    %cst_35 = arith.constant 1.000000e+00 : f32
    %77 = vector.broadcast %cst_34 : f32 to vector<1x8x128xf32>
    %78 = arith.maximumf %77, %76 : vector<1x8x128xf32>
    %79 = vector.broadcast %cst_35 : f32 to vector<1x8x128xf32>
    %80 = arith.minimumf %79, %78 : vector<1x8x128xf32>
    %81 = arith.mulf %11, %80 : vector<1x8x128xf32>
    %82 = arith.subf %8, %81 : vector<1x8x128xf32>
    %cst_36 = arith.constant 0.000000e+00 : f32
    %cst_37 = arith.constant 1.000000e+00 : f32
    %83 = vector.broadcast %cst_36 : f32 to vector<1x8x128xf32>
    %84 = arith.maximumf %83, %82 : vector<1x8x128xf32>
    %85 = vector.broadcast %cst_37 : f32 to vector<1x8x128xf32>
    %86 = arith.minimumf %85, %84 : vector<1x8x128xf32>
    %c0_38 = arith.constant 0 : index
    %c1_39 = arith.constant 1 : index
    %c0_40 = arith.constant 0 : index
    %c0_41 = arith.constant 0 : index
    %87 = vector.load %arg4[%c0_38, %c1_39, %c0_40, %c0_41] : memref<1x3x8x128xf32, #tpu.memory_space<vmem>>, vector<1x1x8x128xf32>
    %88 = vector.shape_cast %87 : vector<1x1x8x128xf32> to vector<1x8x128xf32>
    %89 = vector.shape_cast %86 : vector<1x8x128xf32> to vector<1x1x8x128xf32>
    tpu.vector_store %arg4[%c0_38, %c1_39, %c0_40, %c0_41], %89 {strides = array<i32>} : memref<1x3x8x128xf32, #tpu.memory_space<vmem>>, vector<1x1x8x128xf32>,
    %cst_42 = arith.constant 1.000000e+00 : f32
    %90 = vector.broadcast %cst_42 : f32 to vector<1x8x128xf32>
    %91 = arith.addf %90, %43 : vector<1x8x128xf32>
    %cst_43 = arith.constant 6.000000e+00 : f32
    %92 = vector.broadcast %cst_43 : f32 to vector<1x8x128xf32>
    %93 = arith.cmpf oge, %91, %92 : vector<1x8x128xf32>
    %cst_44 = arith.constant 6.000000e+00 : f32
    %94 = vector.broadcast %cst_44 : f32 to vector<1x8x128xf32>
    %95 = arith.subf %91, %94 : vector<1x8x128xf32>
    %96 = arith.select %93, %95, %91 : vector<1x8x128xi1>, vector<1x8x128xf32>
    %cst_45 = arith.constant 4.000000e+00 : f32
    %97 = vector.broadcast %cst_45 : f32 to vector<1x8x128xf32>
    %98 = arith.subf %97, %96 : vector<1x8x128xf32>
    %99 = arith.minimumf %96, %98 : vector<1x8x128xf32>
    %cst_46 = arith.constant 0.000000e+00 : f32
    %cst_47 = arith.constant 1.000000e+00 : f32
    %100 = vector.broadcast %cst_46 : f32 to vector<1x8x128xf32>
    %101 = arith.maximumf %100, %99 : vector<1x8x128xf32>
    %102 = vector.broadcast %cst_47 : f32 to vector<1x8x128xf32>
    %103 = arith.minimumf %102, %101 : vector<1x8x128xf32>
    %104 = arith.mulf %11, %103 : vector<1x8x128xf32>
    %105 = arith.subf %8, %104 : vector<1x8x128xf32>
    %cst_48 = arith.constant 0.000000e+00 : f32
    %cst_49 = arith.constant 1.000000e+00 : f32
    %106 = vector.broadcast %cst_48 : f32 to vector<1x8x128xf32>
    %107 = arith.maximumf %106, %105 : vector<1x8x128xf32>
    %108 = vector.broadcast %cst_49 : f32 to vector<1x8x128xf32>
    %109 = arith.minimumf %108, %107 : vector<1x8x128xf32>
    %c0_50 = arith.constant 0 : index
    %c2_51 = arith.constant 2 : index
    %c0_52 = arith.constant 0 : index
    %c0_53 = arith.constant 0 : index
    %110 = vector.load %arg4[%c0_50, %c2_51, %c0_52, %c0_53] : memref<1x3x8x128xf32, #tpu.memory_space<vmem>>, vector<1x1x8x128xf32>
    %111 = vector.shape_cast %110 : vector<1x1x8x128xf32> to vector<1x8x128xf32>
    %112 = vector.shape_cast %109 : vector<1x8x128xf32> to vector<1x1x8x128xf32>
    tpu.vector_store %arg4[%c0_50, %c2_51, %c0_52, %c0_53], %112 {strides = array<i32>} : memref<1x3x8x128xf32, #tpu.memory_space<vmem>>, vector<1x1x8x128xf32>,
    return
  }
  func.func @transform_0(%arg0: i32, %arg1: i32) -> i32 {
    %c0_i32 = arith.constant 0 : i32
    %c0_i32_0 = arith.constant 0 : i32
    return %c0_i32 : i32
  }
  func.func @transform_1(%arg0: i32, %arg1: i32) -> (i32, i32, i32, i32) {
    %c0_i32 = arith.constant 0 : i32
    %c0_i32_0 = arith.constant 0 : i32
    %c0_i32_1 = arith.constant 0 : i32
    return %arg0, %c0_i32, %arg1, %c0_i32_0 : i32, i32, i32, i32
  }
  func.func @transform_2(%arg0: i32, %arg1: i32) -> (i32, i32, i32, i32) {
    %c0_i32 = arith.constant 0 : i32
    %c0_i32_0 = arith.constant 0 : i32
    %c0_i32_1 = arith.constant 0 : i32
    return %arg0, %c0_i32, %arg1, %c0_i32_0 : i32, i32, i32, i32
  }
}

</mosaic_0001>

<llo_original>
// kernel: tpu_custom_call.1
$region0: #{tpu_custom_call.1}
  #allocation0 [shape = 'u32[]', space=smem, size = 0x4, offset = 0x4, fixed_abs, tag = 'smem constant byte address 0x4 - core index']
  #allocation1 [shape = 'u32[72,128]{1,0:T(1,128)}', space=vmem, size = 0x9000, scoped, tag = 'internal scratch']
  #allocation2 [shape = 'f32[1]{0:T(128)S(6)}', space=smem, size = 0x200, scoped, tag = 'scoped memory for tpu_custom_call.1']
  %s0 = inlined_call_operand.<no memory space> [shape: f32[1], index: 0, kind: input, shape index: {}]
  %s1 = inlined_call_operand.hbm [shape: f32[1,3,8,128], index: 1, kind: input, shape index: {}]
  %s2 = inlined_call_operand.hbm [shape: f32[1,3,8,128], index: 2, kind: output, shape index: {}]
  %s3 = sld [smem:[#allocation0]]
  $region22: #{tpu_custom_call.1} parent=0
    _
  %s5 = ssub.s32 1, %s3
  %s6 = scalar_select 0, %s5, %s3
  %7 = sst [smem:[#allocation2]] %s0
  $region1: #{tpu_custom_call.1} parent=0
    #allocation3 [shape = 'u8[12288]{0}', space=vmem, size = 0x3000, scoped, tag = 'input window, operand 1, single buffered']
    #allocation4 [shape = 's32[1]{0}', space=sflag, size = 0x4, scoped, tag = 'scoped memory for tpu_custom_call.1']
    #allocation5 [shape = 's32[1]{0}', space=sflag, size = 0x4, scoped, tag = 'scoped memory for tpu_custom_call.1']
    #allocation6 [shape = 'u8[12288]{0}', space=vmem, size = 0x3000, scoped, tag = 'output window, operand 0, single buffered']
    %8 = vsyncpa [#allocation4], 0
    %9 = vsyncpa [#allocation5], 0
    // Predicated region
    $region2: #{tpu_custom_call.1} parent=1 // pred_check
      _
    $region3: #{tpu_custom_call.1} parent=1 // pred_check_branch
      %11 = sbr.rel (0) target = $region5
    $region4: #{tpu_custom_call.1} parent=1 // pred_region
      _
    $region5: #{tpu_custom_call.1} parent=1 // pred_fallthru
      _
    // Predicated region
    $region6: #{tpu_custom_call.1} parent=1 // pred_check
      _
    $region7: #{tpu_custom_call.1} parent=1 // pred_check_branch
      %13 = sbr.rel (0) target = $region9
    $region8: #{tpu_custom_call.1} parent=1 // pred_region
      %15 = vsyncadd [#allocation4], 0
      %s16 = sshll.u32 %s1, 4
      %s17 = int_to_ptr.hbm [resolvable:$true] %s16
      %s18 = sshll.u32 [#allocation3], 4
      %s19 = int_to_ptr.vmem [resolvable:$true] %s18
      %24 = dma.hbm_to_vmem [thread:$0]  %s17, 384, %s19, [#allocation4], 128, 128, 8
    $region9: #{tpu_custom_call.1} parent=1 // pred_fallthru
      _
    // Predicated region
    $region10: #{tpu_custom_call.1} parent=1 // pred_check
      _
    $region11: #{tpu_custom_call.1} parent=1 // pred_check_branch
      %26 = sbr.rel (0) target = $region13
    $region12: #{tpu_custom_call.1} parent=1 // pred_region
      %28 = dma.done [#allocation4], 384
    $region13: #{tpu_custom_call.1} parent=1 // pred_fallthru
      _
    %s29 = sld [smem:[#allocation2]]
    %v30 = vld [vmem:[#allocation3] sm:$0xff]
    %s31 = scalar_lea.vmem [#allocation3], 8
    %v32 = vld [vmem:[%s31] sm:$0xff]
    %s33 = scalar_lea.vmem [#allocation3], 16
    %v34 = vld [vmem:[%s33] sm:$0xff]
    %v35 = vmax.f32 %v30, %v32
    %v36 = vmax.f32 %v35, %v34
    %v37 = vmin.f32 %v30, %v32
    %v38 = vmin.f32 %v37, %v34
    %v39 = vsub.f32 %v36, %v38
    %vm40 = vcmp.eq.f32.partialorder %v39, 0.0
    %v41 = vsel %vm40, 1.0, %v39
    %vm42 = vcmp.eq.f32.partialorder %v36, %v30
    %vm43 = vcmp.eq.f32.partialorder %v36, %v32
    %v44 = vsel %vm43, 2.0, 4.0
    %v45 = vsel %vm42, 0.0, %v44
    %v46 = vsub.f32 %v32, %v34
    %v47 = vsub.f32 %v34, %v30
    %v48 = vsub.f32 %v30, %v32
    %v49 = vsel %vm43, %v47, %v48
    %v50 = vsel %vm42, %v46, %v49
    %v51 = vrcp.pop %v41
    %v52 = vmul.f32 %v41, %v51
    %v53 = vsub.f32 1.0, %v52
    %v54 = vmul.f32 %v51, %v53
    %v55 = vadd.f32 %v51, %v54
    %vm56 = vweird.f32 %v41
    %vm57 = vweird.f32 %v51
    %vm58 = vmor %vm56, %vm57
    %v59 = vsel %vm58, %v51, %v55
    %v60 = vand.u32 2147483647, %v41
    %vm61 = vcmp.eq.f32.partialorder %v60, 8.507059e+37
    %v62 = vand.u32 %v41, 2147483648
    %v63 = vor.u32 1.1754944e-38, %v62
    %v64 = vsel %vm61, %v63, %v59
    %v65 = vmul.f32 %v50, %v64
    %v66 = vadd.f32 %v45, %v65
    %v67 = vstv %s29
    %v68 = vadd.f32 %v66, %v67
    %vm69 = vcmp.lt.f32.partialorder %v68, 0.0
    %v70 = vadd.f32 %v68, 6.0
    %v71 = vsel %vm69, %v70, %v68
    %vm72 = vcmp.ge.f32.partialorder %v71, 6.0
    %v73 = vsub.f32 %v71, 6.0
    %v74 = vsel %vm72, %v73, %v71
    %v75 = vadd.f32 %v74, 5.0
    %vm76 = vcmp.ge.f32.partialorder %v75, 6.0
    %v77 = vsub.f32 %v75, 6.0
    %v78 = vsel %vm76, %v77, %v75
    %v79 = vsub.f32 4.0, %v78
    %v80 = vmin.f32 %v78, %v79
    %v81 = vmax.f32 %v80, 0.0
    %v82 = vmin.f32 %v81, 1.0
    %v83 = vmul.f32 %v39, %v82
    %v84 = vsub.f32 %v36, %v83
    %v85 = vmax.f32 %v84, 0.0
    %v86 = vmin.f32 %v85, 1.0
    %87 = vst [vmem:[#allocation6] sm:$0xff] %v86
    %v88 = vadd.f32 %v74, 3.0
    %vm89 = vcmp.ge.f32.partialorder %v88, 6.0
    %v90 = vsub.f32 %v88, 6.0
    %v91 = vsel %vm89, %v90, %v88
    %v92 = vsub.f32 4.0, %v91
    %v93 = vmin.f32 %v91, %v92
    %v94 = vmax.f32 %v93, 0.0
    %v95 = vmin.f32 %v94, 1.0
    %v96 = vmul.f32 %v39, %v95
    %v97 = vsub.f32 %v36, %v96
    %v98 = vmax.f32 %v97, 0.0
    %v99 = vmin.f32 %v98, 1.0
    %s100 = scalar_lea.vmem [#allocation6], 8
    %101 = vst [vmem:[%s100] sm:$0xff] %v99
    %v102 = vadd.f32 %v74, 1.0
    %vm103 = vcmp.ge.f32.partialorder %v102, 6.0
    %v104 = vsub.f32 %v102, 6.0
    %v105 = vsel %vm103, %v104, %v102
    %v106 = vsub.f32 4.0, %v105
    %v107 = vmin.f32 %v105, %v106
    %v108 = vmax.f32 %v107, 0.0
    %v109 = vmin.f32 %v108, 1.0
    %v110 = vmul.f32 %v39, %v109
    %v111 = vsub.f32 %v36, %v110
    %v112 = vmax.f32 %v111, 0.0
    %v113 = vmin.f32 %v112, 1.0
    %s114 = scalar_lea.vmem [#allocation6], 16
    %115 = vst [vmem:[%s114] sm:$0xff] %v113
    // Predicated region
    $region14: #{tpu_custom_call.1} parent=1 // pred_check
      _
    $region15: #{tpu_custom_call.1} parent=1 // pred_check_branch
      %117 = sbr.rel (0) target = $region17
    $region16: #{tpu_custom_call.1} parent=1 // pred_region
      %119 = vsyncadd [#allocation5], 0
      %s120 = sshll.u32 [#allocation6], 4
      %s121 = int_to_ptr.vmem [resolvable:$true] %s120
      %s122 = sshll.u32 %s2, 4
      %s123 = int_to_ptr.hbm [resolvable:$true] %s122
      %128 = dma.vmem_to_hbm [thread:$0]  %s121, 384, %s123, [#allocation5], 128, 128, 8
    $region17: #{tpu_custom_call.1} parent=1 // pred_fallthru
      _
    // Predicated region
    $region18: #{tpu_custom_call.1} parent=1 // pred_check
      _
    $region19: #{tpu_custom_call.1} parent=1 // pred_check_branch
      %130 = sbr.rel (0) target = $region21
    $region20: #{tpu_custom_call.1} parent=1 // pred_region
      %132 = dma.done [#allocation5], 384
    $region21: #{tpu_custom_call.1} parent=1 // pred_fallthru
      _
    %133 = vsyncpa [#allocation4], 1
    %134 = vsyncpa [#allocation5], 1

</llo_original>
